<compile_context>
chip_gen: v5e
topology: v5e:2x2
jax: 0.10.0
libtpu: 0.0.40
codegen_flags: <defaults>
</compile_context>

<pallas_src>
import math
from functools import reduce

import jax
import jax.numpy as jnp
from jax.experimental import pallas as pl
from jax.experimental.pallas import tpu as pltpu

TEMP_FEAT_NAMES = ("hour", "weekday", "month")   # C = 3 temporal feature channels


def _round_up(x, m):
    return ((x + m - 1) // m) * m


# ---------------------------------------------------------------------------
# Kernel: one batch tile per grid step; both attention stages fused.
#   q_ref: (TB, Q)   embed refs: C x (TB, L, E)
#   w_ref: (Q, 2E)   b_ref: (1, 2E)   out_ref: (TB, E)
# ---------------------------------------------------------------------------
def temp_att_kernel(q_ref, *rest):
    *embed_refs, w_ref, b_ref, out_ref = rest
    E = out_ref.shape[-1]
    scale = 1.0 / math.sqrt(E)

    # Fused query projection for both attention modules: one MXU matmul.
    q = q_ref[...].astype(jnp.float32)                                # (TB, Q)
    qp = jnp.dot(q, w_ref[...], preferred_element_type=jnp.float32) + b_ref[...]
    # Fold the 1/sqrt(E) softmax scale into the queries once (hoisted out of
    # the per-channel loop).
    q_rec = (qp[:, :E] * scale)[:, None, :]                           # (TB, 1, E)
    q_comb = qp[:, E:] * scale                                        # (TB, E)

    # ---- stage 1 ("rec"): per-channel scaled dot-product attention ---------
    # Per-batch contractions are tiny (K=E, N=L) -> VPU multiply + short
    # reductions, NOT batched MXU matmuls.
    rec_list = []
    for e_ref in embed_refs:                                          # C small & static
        emb = e_ref[...].astype(jnp.float32)                          # (TB, L, E)
        s = jnp.sum(emb * q_rec, axis=-1)                             # (TB, L): reduce over E
        m = jnp.max(s, axis=-1, keepdims=True)
        p = jnp.exp(s - m)
        inv = pl.reciprocal(jnp.sum(p, axis=-1, keepdims=True), approx=True)
        attn = (p * inv)[:, :, None]                                  # (TB, L, 1)
        rec_list.append(jnp.sum(attn * emb, axis=1))                  # (TB, E): reduce over L

    # ---- stage 2 ("comb"): attention over the C per-feature embeddings -----
    s_list = [jnp.sum(r * q_comb, axis=-1, keepdims=True) for r in rec_list]  # (TB, 1)
    m = reduce(jnp.maximum, s_list)
    e_list = [jnp.exp(s - m) for s in s_list]
    denom = reduce(jnp.add, e_list)
    num = reduce(jnp.add, [e * r for e, r in zip(e_list, rec_list)])
    out_ref[...] = (num * pl.reciprocal(denom, approx=True)).astype(out_ref.dtype)


# ---------------------------------------------------------------------------
# Wrapper
# ---------------------------------------------------------------------------
def temp_att_layer(query_feat, embed_feat_dict, params, *, tile_b=None,
                   vmem_tile_budget_bytes=24 * 1024 * 1024):
    """query_feat: (B, Q); embed_feat_dict[name]: (B, L, E) -> (B, E) float32.

    Inputs may be f32 or bf16 (storage-only); all math runs in f32 in-kernel.
    """
    wq_rec, bq_rec, wq_comb, bq_comb = params
    # C separate kernel inputs (no jnp.stack -> no extra HBM copy of C*B*L*E).
    embeds = [embed_feat_dict[n] for n in TEMP_FEAT_NAMES]
    B, Q = query_feat.shape
    C = len(embeds)
    L, E = embeds[0].shape[1:]

    # Fuse the two query projections: one (Q, 2E) weight / (1, 2E) bias.
    w_fused = jnp.concatenate([wq_rec, wq_comb], axis=1).astype(jnp.float32)
    b_fused = jnp.concatenate([bq_rec, bq_comb], axis=1).astype(jnp.float32)

    # Batch tile: largest multiple of 8 whose double-buffered working set fits
    # the per-step VMEM budget (safe on v7x's 64 MiB VMEM); cap 2048 (f32) /
    # 4096 (bf16); for large B keep >= 2 grid steps so both v7x TensorCores
    # get work via the "parallel" grid axis.
    itemsize = jnp.dtype(query_feat.dtype).itemsize
    bytes_per_row = (Q + C * L * E + E) * itemsize
    if tile_b is None:
        tile_b = vmem_tile_budget_bytes // (2 * max(bytes_per_row, 1))
        tile_b = min(2048 if itemsize >= 4 else 4096, tile_b)
        if B > 8:
            tile_b = min(tile_b, _round_up(pl.cdiv(B, 2), 8))
    tile_b = max(8, (min(tile_b, _round_up(B, 8)) // 8) * 8)

    # No padding of the batch: ragged / short tiles are handled by Pallas
    # partial-block masking (rows are independent, masked rows never land in
    # the output).
    grid = (pl.cdiv(B, tile_b),)
    embed_specs = [pl.BlockSpec((tile_b, L, E), lambda i: (i, 0, 0)) for _ in range(C)]

    out = pl.pallas_call(
        temp_att_kernel,
        out_shape=jax.ShapeDtypeStruct((B, E), jnp.float32),
        grid=grid,
        in_specs=[pl.BlockSpec((tile_b, Q), lambda i: (i, 0))]
        + embed_specs
        + [pl.BlockSpec((Q, 2 * E), lambda i: (0, 0)),
           pl.BlockSpec((1, 2 * E), lambda i: (0, 0))],
        out_specs=pl.BlockSpec((tile_b, E), lambda i: (i, 0)),
        compiler_params=pltpu.CompilerParams(
            dimension_semantics=("parallel",),        # shard batch tiles across TCs (v7x)
            vmem_limit_bytes=32 * 1024 * 1024),       # <= 32 MiB: safe on v7x's 64 MiB VMEM
    )(query_feat, *embeds, w_fused, b_fused)
    return out


# ---------------------------------------------------------------------------
# Pure-JAX reference (mirrors the assumed PyTorch semantics) for validation.
# ---------------------------------------------------------------------------
def temp_att_reference(query_feat, embed_feat_dict, params):
    wq_rec, bq_rec, wq_comb, bq_comb = params
    E = wq_rec.shape[-1]
    scale = 1.0 / math.sqrt(E)
    hp = jax.lax.Precision.HIGHEST
    qf = query_feat.astype(jnp.float32)
    efd = {k: v.astype(jnp.float32) for k, v in embed_feat_dict.items()}

    def sdpa(q_proj, emb):                               # emb: (B, L, E)
        scores = jnp.einsum('ble,be->bl', emb, q_proj, precision=hp) * scale
        attn = jax.nn.softmax(scores, axis=-1)
        return jnp.einsum('bl,ble->be', attn, emb, precision=hp)

    q_rec = jnp.dot(qf, wq_rec, precision=hp) + bq_rec
    q_comb = jnp.dot(qf, wq_comb, precision=hp) + bq_comb
    rec = jnp.stack([sdpa(q_rec, efd[n]) for n in TEMP_FEAT_NAMES], axis=1)
    scores = jnp.einsum('bce,be->bc', rec, q_comb, precision=hp) * scale
    attn = jax.nn.softmax(scores, axis=-1)
    return jnp.einsum('bc,bce->be', attn, rec, precision=hp)


def _make_inputs(key, B, Q, E, L, dtype=jnp.float32):
    k_q, k_emb, k_wr, k_br, k_wc, k_bc = jax.random.split(key, 6)
    query_feat = jax.random.normal(k_q, (B, Q), dtype=jnp.float32).astype(dtype)
    emb_keys = jax.random.split(k_emb, len(TEMP_FEAT_NAMES))
    embed_feat_dict = {
        name: jax.random.normal(ek, (B, L, E), dtype=jnp.float32).astype(dtype)
        for name, ek in zip(TEMP_FEAT_NAMES, emb_keys)
    }
    bound = 1.0 / math.sqrt(Q)                           # nn.Linear-style init
    wq_rec = jax.random.uniform(k_wr, (Q, E), jnp.float32, -bound, bound)
    bq_rec = jax.random.uniform(k_br, (1, E), jnp.float32, -bound, bound)
    wq_comb = jax.random.uniform(k_wc, (Q, E), jnp.float32, -bound, bound)
    bq_comb = jax.random.uniform(k_bc, (1, E), jnp.float32, -bound, bound)
    return query_feat, embed_feat_dict, (wq_rec, bq_rec, wq_comb, bq_comb)


if __name__ == "__main__":
    Q, E, L = 16, 32, 8                                  # query_dim, embed_dim, seq len
    # Tolerance accounts for pl.reciprocal(approx=True) in the softmax divides.
    TOL = dict(atol=5e-3, rtol=5e-3)

    # Case 1: tiny batch -> single partial tile (B=2 < tile_b=8, masked store).
    qf, efd, params = _make_inputs(jax.random.PRNGKey(0), 2, Q, E, L)
    out = jax.block_until_ready(temp_att_layer(qf, efd, params))
    ref = temp_att_reference(qf, efd, params)
    assert out.shape == (2, E)
    assert bool(jnp.all(jnp.isfinite(out)))
    assert jnp.allclose(out, ref, **TOL), "case1 mismatch vs reference"

    # Case 2: multi-tile grid with a ragged tail (B=20, tile_b=8 -> grid of 3).
    qf, efd, params = _make_inputs(jax.random.PRNGKey(0), 20, Q, E, L)
    out = jax.block_until_ready(temp_att_layer(qf, efd, params, tile_b=8))
    ref = temp_att_reference(qf, efd, params)
    assert out.shape == (20, E)
    assert jnp.allclose(out, ref, **TOL), "case2 mismatch vs reference"

    # Case 3: bf16 HBM storage (halves input traffic), f32 compute in-kernel.
    qf, efd, params = _make_inputs(jax.random.PRNGKey(0), 20, Q, E, L,
                                   dtype=jnp.bfloat16)
    out = jax.block_until_ready(temp_att_layer(qf, efd, params))
    ref = temp_att_reference(qf, efd, params)
    assert out.shape == (20, E) and out.dtype == jnp.float32
    assert jnp.allclose(out, ref, **TOL), "case3 mismatch vs reference"

    print("KERNEL_OK")
</pallas_src>

<mosaic_0001>
module attributes {stable_mosaic.version = 11 : i64} {
  func.func @temp_att_kernel(%arg0: i32, %arg1: memref<8x16xf32, #tpu.memory_space<vmem>>, %arg2: memref<8x8x32xf32, #tpu.memory_space<vmem>>, %arg3: memref<8x8x32xf32, #tpu.memory_space<vmem>>, %arg4: memref<8x8x32xf32, #tpu.memory_space<vmem>>, %arg5: memref<16x64xf32, #tpu.memory_space<vmem>>, %arg6: memref<1x64xf32, #tpu.memory_space<vmem>>, %arg7: memref<8x32xf32, #tpu.memory_space<vmem>>) attributes {dimension_semantics = [#tpu.dimension_semantics<parallel>], iteration_bounds = array<i64: 1>, scalar_prefetch = 0 : i64, scratch_operands = 0 : i64, tpu.core_type = #tpu.core_type<tc>, window_params = [{transform_indices = @transform_0, window_bounds = array<i64: 8, 16>}, {transform_indices = @transform_1, window_bounds = array<i64: 8, 8, 32>}, {transform_indices = @transform_2, window_bounds = array<i64: 8, 8, 32>}, {transform_indices = @transform_3, window_bounds = array<i64: 8, 8, 32>}, {pipeline_mode = #tpu.pipeline_mode<synchronous>, transform_indices = @transform_4, window_bounds = array<i64: 16, 64>}, {pipeline_mode = #tpu.pipeline_mode<synchronous>, transform_indices = @transform_5, window_bounds = array<i64: 1, 64>}, {transform_indices = @transform_6, window_bounds = array<i64: 8, 32>}]} {
    %c0 = arith.constant 0 : index
    %c0_0 = arith.constant 0 : index
    %0 = vector.load %arg1[%c0, %c0_0] : memref<8x16xf32, #tpu.memory_space<vmem>>, vector<8x16xf32>
    %c0_1 = arith.constant 0 : index
    %c0_2 = arith.constant 0 : index
    %1 = vector.load %arg5[%c0_1, %c0_2] : memref<16x64xf32, #tpu.memory_space<vmem>>, vector<16x64xf32>
    %cst = arith.constant dense<0.000000e+00> : vector<8x64xf32>
    %2 = tpu.matmul %0, %1, %cst {dimension_numbers = #tpu.dot_dimension_numbers<[1], [0], [0], [1], [0, 0, 1, 1], [], []>} : vector<8x16xf32>, vector<16x64xf32>, vector<8x64xf32> -> vector<8x64xf32>
    %c0_3 = arith.constant 0 : index
    %c0_4 = arith.constant 0 : index
    %3 = vector.load %arg6[%c0_3, %c0_4] : memref<1x64xf32, #tpu.memory_space<vmem>>, vector<1x64xf32>
    %4 = vector.broadcast %3 : vector<1x64xf32> to vector<8x64xf32>
    %5 = arith.addf %2, %4 : vector<8x64xf32>
    %6 = vector.extract_strided_slice %5 {offsets = [0, 0], sizes = [8, 32], strides = [1, 1]} : vector<8x64xf32> to vector<8x32xf32>
    %cst_5 = arith.constant 0.176776692 : f32
    %7 = vector.broadcast %cst_5 : f32 to vector<8x32xf32>
    %8 = arith.mulf %6, %7 : vector<8x32xf32>
    %9 = vector.shape_cast %8 : vector<8x32xf32> to vector<8x1x32xf32>
    %10 = vector.extract_strided_slice %5 {offsets = [0, 32], sizes = [8, 32], strides = [1, 1]} : vector<8x64xf32> to vector<8x32xf32>
    %cst_6 = arith.constant 0.176776692 : f32
    %11 = vector.broadcast %cst_6 : f32 to vector<8x32xf32>
    %12 = arith.mulf %10, %11 : vector<8x32xf32>
    %c0_7 = arith.constant 0 : index
    %c0_8 = arith.constant 0 : index
    %c0_9 = arith.constant 0 : index
    %13 = vector.load %arg2[%c0_7, %c0_8, %c0_9] : memref<8x8x32xf32, #tpu.memory_space<vmem>>, vector<8x8x32xf32>
    %14 = vector.broadcast %9 : vector<8x1x32xf32> to vector<8x8x32xf32>
    %15 = arith.mulf %13, %14 : vector<8x8x32xf32>
    %cst_10 = arith.constant dense<0.000000e+00> : vector<8x8xf32>
    %16 = vector.multi_reduction <add>, %15, %cst_10 [2] : vector<8x8x32xf32> to vector<8x8xf32>
    %cst_11 = arith.constant dense<0xFF800000> : vector<8xf32>
    %17 = vector.multi_reduction <maximumf>, %16, %cst_11 [1] : vector<8x8xf32> to vector<8xf32>
    %18 = vector.shape_cast %17 : vector<8xf32> to vector<8x1xf32>
    %19 = vector.broadcast %18 : vector<8x1xf32> to vector<8x8xf32>
    %20 = arith.subf %16, %19 : vector<8x8xf32>
    %21 = math.exp %20 : vector<8x8xf32>
    %cst_12 = arith.constant dense<0.000000e+00> : vector<8xf32>
    %22 = vector.multi_reduction <add>, %21, %cst_12 [1] : vector<8x8xf32> to vector<8xf32>
    %23 = vector.shape_cast %22 : vector<8xf32> to vector<8x1xf32>
    %24 = tpu.reciprocal %23 {approx = true} : vector<8x1xf32> -> vector<8x1xf32>
    %25 = vector.broadcast %24 : vector<8x1xf32> to vector<8x8xf32>
    %26 = arith.mulf %21, %25 : vector<8x8xf32>
    %27 = vector.shape_cast %26 : vector<8x8xf32> to vector<8x8x1xf32>
    %28 = vector.broadcast %27 : vector<8x8x1xf32> to vector<8x8x32xf32>
    %29 = arith.mulf %28, %13 : vector<8x8x32xf32>
    %cst_13 = arith.constant dense<0.000000e+00> : vector<8x32xf32>
    %30 = vector.multi_reduction <add>, %29, %cst_13 [1] : vector<8x8x32xf32> to vector<8x32xf32>
    %c0_14 = arith.constant 0 : index
    %c0_15 = arith.constant 0 : index
    %c0_16 = arith.constant 0 : index
    %31 = vector.load %arg3[%c0_14, %c0_15, %c0_16] : memref<8x8x32xf32, #tpu.memory_space<vmem>>, vector<8x8x32xf32>
    %32 = vector.broadcast %9 : vector<8x1x32xf32> to vector<8x8x32xf32>
    %33 = arith.mulf %31, %32 : vector<8x8x32xf32>
    %cst_17 = arith.constant dense<0.000000e+00> : vector<8x8xf32>
    %34 = vector.multi_reduction <add>, %33, %cst_17 [2] : vector<8x8x32xf32> to vector<8x8xf32>
    %cst_18 = arith.constant dense<0xFF800000> : vector<8xf32>
    %35 = vector.multi_reduction <maximumf>, %34, %cst_18 [1] : vector<8x8xf32> to vector<8xf32>
    %36 = vector.shape_cast %35 : vector<8xf32> to vector<8x1xf32>
    %37 = vector.broadcast %36 : vector<8x1xf32> to vector<8x8xf32>
    %38 = arith.subf %34, %37 : vector<8x8xf32>
    %39 = math.exp %38 : vector<8x8xf32>
    %cst_19 = arith.constant dense<0.000000e+00> : vector<8xf32>
    %40 = vector.multi_reduction <add>, %39, %cst_19 [1] : vector<8x8xf32> to vector<8xf32>
    %41 = vector.shape_cast %40 : vector<8xf32> to vector<8x1xf32>
    %42 = tpu.reciprocal %41 {approx = true} : vector<8x1xf32> -> vector<8x1xf32>
    %43 = vector.broadcast %42 : vector<8x1xf32> to vector<8x8xf32>
    %44 = arith.mulf %39, %43 : vector<8x8xf32>
    %45 = vector.shape_cast %44 : vector<8x8xf32> to vector<8x8x1xf32>
    %46 = vector.broadcast %45 : vector<8x8x1xf32> to vector<8x8x32xf32>
    %47 = arith.mulf %46, %31 : vector<8x8x32xf32>
    %cst_20 = arith.constant dense<0.000000e+00> : vector<8x32xf32>
    %48 = vector.multi_reduction <add>, %47, %cst_20 [1] : vector<8x8x32xf32> to vector<8x32xf32>
    %c0_21 = arith.constant 0 : index
    %c0_22 = arith.constant 0 : index
    %c0_23 = arith.constant 0 : index
    %49 = vector.load %arg4[%c0_21, %c0_22, %c0_23] : memref<8x8x32xf32, #tpu.memory_space<vmem>>, vector<8x8x32xf32>
    %50 = vector.broadcast %9 : vector<8x1x32xf32> to vector<8x8x32xf32>
    %51 = arith.mulf %49, %50 : vector<8x8x32xf32>
    %cst_24 = arith.constant dense<0.000000e+00> : vector<8x8xf32>
    %52 = vector.multi_reduction <add>, %51, %cst_24 [2] : vector<8x8x32xf32> to vector<8x8xf32>
    %cst_25 = arith.constant dense<0xFF800000> : vector<8xf32>
    %53 = vector.multi_reduction <maximumf>, %52, %cst_25 [1] : vector<8x8xf32> to vector<8xf32>
    %54 = vector.shape_cast %53 : vector<8xf32> to vector<8x1xf32>
    %55 = vector.broadcast %54 : vector<8x1xf32> to vector<8x8xf32>
    %56 = arith.subf %52, %55 : vector<8x8xf32>
    %57 = math.exp %56 : vector<8x8xf32>
    %cst_26 = arith.constant dense<0.000000e+00> : vector<8xf32>
    %58 = vector.multi_reduction <add>, %57, %cst_26 [1] : vector<8x8xf32> to vector<8xf32>
    %59 = vector.shape_cast %58 : vector<8xf32> to vector<8x1xf32>
    %60 = tpu.reciprocal %59 {approx = true} : vector<8x1xf32> -> vector<8x1xf32>
    %61 = vector.broadcast %60 : vector<8x1xf32> to vector<8x8xf32>
    %62 = arith.mulf %57, %61 : vector<8x8xf32>
    %63 = vector.shape_cast %62 : vector<8x8xf32> to vector<8x8x1xf32>
    %64 = vector.broadcast %63 : vector<8x8x1xf32> to vector<8x8x32xf32>
    %65 = arith.mulf %64, %49 : vector<8x8x32xf32>
    %cst_27 = arith.constant dense<0.000000e+00> : vector<8x32xf32>
    %66 = vector.multi_reduction <add>, %65, %cst_27 [1] : vector<8x8x32xf32> to vector<8x32xf32>
    %67 = arith.mulf %30, %12 : vector<8x32xf32>
    %cst_28 = arith.constant dense<0.000000e+00> : vector<8xf32>
    %68 = vector.multi_reduction <add>, %67, %cst_28 [1] : vector<8x32xf32> to vector<8xf32>
    %69 = vector.shape_cast %68 : vector<8xf32> to vector<8x1xf32>
    %70 = arith.mulf %48, %12 : vector<8x32xf32>
    %cst_29 = arith.constant dense<0.000000e+00> : vector<8xf32>
    %71 = vector.multi_reduction <add>, %70, %cst_29 [1] : vector<8x32xf32> to vector<8xf32>
    %72 = vector.shape_cast %71 : vector<8xf32> to vector<8x1xf32>
    %73 = arith.mulf %66, %12 : vector<8x32xf32>
    %cst_30 = arith.constant dense<0.000000e+00> : vector<8xf32>
    %74 = vector.multi_reduction <add>, %73, %cst_30 [1] : vector<8x32xf32> to vector<8xf32>
    %75 = vector.shape_cast %74 : vector<8xf32> to vector<8x1xf32>
    %76 = arith.maximumf %69, %72 : vector<8x1xf32>
    %77 = arith.maximumf %76, %75 : vector<8x1xf32>
    %78 = arith.subf %69, %77 : vector<8x1xf32>
    %79 = math.exp %78 : vector<8x1xf32>
    %80 = arith.subf %72, %77 : vector<8x1xf32>
    %81 = math.exp %80 : vector<8x1xf32>
    %82 = arith.subf %75, %77 : vector<8x1xf32>
    %83 = math.exp %82 : vector<8x1xf32>
    %84 = arith.addf %79, %81 : vector<8x1xf32>
    %85 = arith.addf %84, %83 : vector<8x1xf32>
    %86 = vector.broadcast %79 : vector<8x1xf32> to vector<8x32xf32>
    %87 = arith.mulf %86, %30 : vector<8x32xf32>
    %88 = vector.broadcast %81 : vector<8x1xf32> to vector<8x32xf32>
    %89 = arith.mulf %88, %48 : vector<8x32xf32>
    %90 = vector.broadcast %83 : vector<8x1xf32> to vector<8x32xf32>
    %91 = arith.mulf %90, %66 : vector<8x32xf32>
    %92 = arith.addf %87, %89 : vector<8x32xf32>
    %93 = arith.addf %92, %91 : vector<8x32xf32>
    %94 = tpu.reciprocal %85 {approx = true} : vector<8x1xf32> -> vector<8x1xf32>
    %95 = vector.broadcast %94 : vector<8x1xf32> to vector<8x32xf32>
    %96 = arith.mulf %93, %95 : vector<8x32xf32>
    %c0_31 = arith.constant 0 : index
    %c0_32 = arith.constant 0 : index
    %97 = vector.load %arg7[%c0_31, %c0_32] : memref<8x32xf32, #tpu.memory_space<vmem>>, vector<8x32xf32>
    tpu.vector_store %arg7[%c0_31, %c0_32], %96 {strides = array<i32>} : memref<8x32xf32, #tpu.memory_space<vmem>>, vector<8x32xf32>,
    return
  }
  func.func @transform_0(%arg0: i32) -> (i32, i32) {
    %c0_i32 = arith.constant 0 : i32
    %c0_i32_0 = arith.constant 0 : i32
    return %arg0, %c0_i32 : i32, i32
  }
  func.func @transform_1(%arg0: i32) -> (i32, i32, i32) {
    %c0_i32 = arith.constant 0 : i32
    %c0_i32_0 = arith.constant 0 : i32
    %c0_i32_1 = arith.constant 0 : i32
    return %arg0, %c0_i32, %c0_i32_0 : i32, i32, i32
  }
  func.func @transform_2(%arg0: i32) -> (i32, i32, i32) {
    %c0_i32 = arith.constant 0 : i32
    %c0_i32_0 = arith.constant 0 : i32
    %c0_i32_1 = arith.constant 0 : i32
    return %arg0, %c0_i32, %c0_i32_0 : i32, i32, i32
  }
  func.func @transform_3(%arg0: i32) -> (i32, i32, i32) {
    %c0_i32 = arith.constant 0 : i32
    %c0_i32_0 = arith.constant 0 : i32
    %c0_i32_1 = arith.constant 0 : i32
    return %arg0, %c0_i32, %c0_i32_0 : i32, i32, i32
  }
  func.func @transform_4(%arg0: i32) -> (i32, i32) {
    %c0_i32 = arith.constant 0 : i32
    %c0_i32_0 = arith.constant 0 : i32
    %c0_i32_1 = arith.constant 0 : i32
    return %c0_i32, %c0_i32_0 : i32, i32
  }
  func.func @transform_5(%arg0: i32) -> (i32, i32) {
    %c0_i32 = arith.constant 0 : i32
    %c0_i32_0 = arith.constant 0 : i32
    %c0_i32_1 = arith.constant 0 : i32
    return %c0_i32, %c0_i32_0 : i32, i32
  }
  func.func @transform_6(%arg0: i32) -> (i32, i32) {
    %c0_i32 = arith.constant 0 : i32
    %c0_i32_0 = arith.constant 0 : i32
    return %arg0, %c0_i32 : i32, i32
  }
}

</mosaic_0001>

<llo_original>
// kernel: tpu_custom_call.1
$region0: #{tpu_custom_call.1}
  #allocation0 [shape = 'u32[]', space=smem, size = 0x4, offset = 0x4, fixed_abs, tag = 'smem constant byte address 0x4 - core index']
  #allocation1 [shape = 'u32[72,128]{1,0:T(1,128)}', space=vmem, size = 0x9000, scoped, tag = 'internal scratch']
  %s0 = inlined_call_operand.hbm [shape: f32[2,16], index: 0, kind: input, shape index: {}]
  %s1 = inlined_call_operand.hbm [shape: f32[2,8,32], index: 1, kind: input, shape index: {}]
  %s2 = inlined_call_operand.hbm [shape: f32[2,8,32], index: 2, kind: input, shape index: {}]
  %s3 = inlined_call_operand.hbm [shape: f32[2,8,32], index: 3, kind: input, shape index: {}]
  %s4 = inlined_call_operand.hbm [shape: f32[16,64], index: 4, kind: input, shape index: {}]
  %s5 = inlined_call_operand.vmem [shape: f32[1,64], index: 5, kind: input, shape index: {}]
  %s6 = inlined_call_operand.hbm [shape: f32[2,32], index: 6, kind: output, shape index: {}]
  %s7 = sld [smem:[#allocation0]]
  $region54: #{tpu_custom_call.1} parent=0
    _
  %s9 = ssub.s32 1, %s7
  %s10 = scalar_select 0, %s9, %s7
  $region1: #{tpu_custom_call.1} parent=0
    #allocation2 [shape = 'u8[4096]{0}', space=vmem, size = 0x1000, scoped, tag = 'input window, operand 0, single buffered']
    #allocation3 [shape = 's32[1]{0}', space=sflag, size = 0x4, scoped, tag = 'scoped memory for tpu_custom_call.1']
    #allocation4 [shape = 's32[1]{0}', space=sflag, size = 0x4, scoped, tag = 'scoped memory for tpu_custom_call.1']
    #allocation5 [shape = 'u8[32768]{0}', space=vmem, size = 0x8000, scoped, tag = 'input window, operand 1, single buffered']
    #allocation6 [shape = 's32[1]{0}', space=sflag, size = 0x4, scoped, tag = 'scoped memory for tpu_custom_call.1']
    #allocation7 [shape = 'u8[32768]{0}', space=vmem, size = 0x8000, scoped, tag = 'input window, operand 2, single buffered']
    #allocation8 [shape = 'u8[32768]{0}', space=vmem, size = 0x8000, scoped, tag = 'input window, operand 3, single buffered']
    #allocation9 [shape = 's32[1]{0}', space=sflag, size = 0x4, scoped, tag = 'scoped memory for tpu_custom_call.1']
    #allocation10 [shape = 'u8[8192]{0}', space=vmem, size = 0x2000, scoped, tag = 'input window, operand 4, single buffered']
    #allocation11 [shape = 'u8[4096]{0}', space=vmem, size = 0x1000, scoped, tag = 'output window, operand 0, single buffered']
    %11 = vsyncpa [#allocation3], 0
    %12 = vsyncpa [#allocation6], 0
    %13 = vsyncpa [#allocation9], 0
    %14 = vsyncpa [#allocation4], 0
    // Predicated region
    $region2: #{tpu_custom_call.1} parent=1 // pred_check
      _
    $region3: #{tpu_custom_call.1} parent=1 // pred_check_branch
      %16 = sbr.rel (0) target = $region5
    $region4: #{tpu_custom_call.1} parent=1 // pred_region
      %18 = vsyncadd [#allocation3], 96
      %s19 = sshll.u32 %s0, 4
      %s20 = int_to_ptr.hbm [resolvable:$true] %s19
      %s21 = sshll.u32 [#allocation2], 4
      %s22 = int_to_ptr.vmem [resolvable:$true] %s21
      %27 = dma.hbm_to_vmem [thread:$0]  %s20, 32, %s22, [#allocation3], 32, 32, 2
    $region5: #{tpu_custom_call.1} parent=1 // pred_fallthru
      _
    // Predicated region
    $region6: #{tpu_custom_call.1} parent=1 // pred_check
      _
    $region7: #{tpu_custom_call.1} parent=1 // pred_check_branch
      %29 = sbr.rel (0) target = $region9
    $region8: #{tpu_custom_call.1} parent=1 // pred_region
      %31 = vsyncadd [#allocation6], 768
      %s32 = sshll.u32 %s1, 4
      %s33 = int_to_ptr.hbm [resolvable:$true] %s32
      %s34 = sshll.u32 [#allocation5], 4
      %s35 = int_to_ptr.vmem [resolvable:$true] %s34
      %40 = dma.hbm_to_vmem [thread:$0]  %s33, 256, %s35, [#allocation6], 128, 128, 8
    $region9: #{tpu_custom_call.1} parent=1 // pred_fallthru
      _
    // Predicated region
    $region10: #{tpu_custom_call.1} parent=1 // pred_check
      _
    $region11: #{tpu_custom_call.1} parent=1 // pred_check_branch
      %42 = sbr.rel (0) target = $region13
    $region12: #{tpu_custom_call.1} parent=1 // pred_region
      %44 = vsyncadd [#allocation6], 768
      %s45 = sshll.u32 %s2, 4
      %s46 = int_to_ptr.hbm [resolvable:$true] %s45
      %s47 = sshll.u32 [#allocation7], 4
      %s48 = int_to_ptr.vmem [resolvable:$true] %s47
      %53 = dma.hbm_to_vmem [thread:$0]  %s46, 256, %s48, [#allocation6], 128, 128, 8
    $region13: #{tpu_custom_call.1} parent=1 // pred_fallthru
      _
    // Predicated region
    $region14: #{tpu_custom_call.1} parent=1 // pred_check
      _
    $region15: #{tpu_custom_call.1} parent=1 // pred_check_branch
      %55 = sbr.rel (0) target = $region17
    $region16: #{tpu_custom_call.1} parent=1 // pred_region
      %57 = vsyncadd [#allocation9], 768
      %s58 = sshll.u32 %s3, 4
      %s59 = int_to_ptr.hbm [resolvable:$true] %s58
      %s60 = sshll.u32 [#allocation8], 4
      %s61 = int_to_ptr.vmem [resolvable:$true] %s60
      %66 = dma.hbm_to_vmem [thread:$0]  %s59, 256, %s61, [#allocation9], 128, 128, 8
    $region17: #{tpu_custom_call.1} parent=1 // pred_fallthru
      _
    // Predicated region
    $region18: #{tpu_custom_call.1} parent=1 // pred_check
      _
    $region19: #{tpu_custom_call.1} parent=1 // pred_check_branch
      %68 = sbr.rel (0) target = $region21
    $region20: #{tpu_custom_call.1} parent=1 // pred_region
      %70 = vsyncadd [#allocation9], 0
      %s71 = sshll.u32 %s4, 4
      %s72 = int_to_ptr.hbm [resolvable:$true] %s71
      %s73 = sshll.u32 [#allocation10], 4
      %s74 = int_to_ptr.vmem [resolvable:$true] %s73
      %79 = dma.hbm_to_vmem [thread:$0]  %s72, 256, %s74, [#allocation9], 128, 128, 8
    $region21: #{tpu_custom_call.1} parent=1 // pred_fallthru
      _
    // Predicated region
    $region22: #{tpu_custom_call.1} parent=1 // pred_check
      _
    $region23: #{tpu_custom_call.1} parent=1 // pred_check_branch
      %81 = sbr.rel (0) target = $region25
    $region24: #{tpu_custom_call.1} parent=1 // pred_region
      _
    $region25: #{tpu_custom_call.1} parent=1 // pred_fallthru
      _
    // Predicated region
    $region26: #{tpu_custom_call.1} parent=1 // pred_check
      _
    $region27: #{tpu_custom_call.1} parent=1 // pred_check_branch
      %83 = sbr.rel (0) target = $region29
    $region28: #{tpu_custom_call.1} parent=1 // pred_region
      %85 = dma.done [#allocation3], 128
    $region29: #{tpu_custom_call.1} parent=1 // pred_fallthru
      _
    // Predicated region
    $region30: #{tpu_custom_call.1} parent=1 // pred_check
      _
    $region31: #{tpu_custom_call.1} parent=1 // pred_check_branch
      %87 = sbr.rel (0) target = $region33
    $region32: #{tpu_custom_call.1} parent=1 // pred_region
      %89 = dma.done [#allocation6], 1024
    $region33: #{tpu_custom_call.1} parent=1 // pred_fallthru
      _
    // Predicated region
    $region34: #{tpu_custom_call.1} parent=1 // pred_check
      _
    $region35: #{tpu_custom_call.1} parent=1 // pred_check_branch
      %91 = sbr.rel (0) target = $region37
    $region36: #{tpu_custom_call.1} parent=1 // pred_region
      %93 = dma.done [#allocation6], 1024
    $region37: #{tpu_custom_call.1} parent=1 // pred_fallthru
      _
    // Predicated region
    $region38: #{tpu_custom_call.1} parent=1 // pred_check
      _
    $region39: #{tpu_custom_call.1} parent=1 // pred_check_branch
      %95 = sbr.rel (0) target = $region41
    $region40: #{tpu_custom_call.1} parent=1 // pred_region
      %97 = dma.done [#allocation9], 1024
    $region41: #{tpu_custom_call.1} parent=1 // pred_fallthru
      _
    // Predicated region
    $region42: #{tpu_custom_call.1} parent=1 // pred_check
      _
    $region43: #{tpu_custom_call.1} parent=1 // pred_check_branch
      %99 = sbr.rel (0) target = $region45
    $region44: #{tpu_custom_call.1} parent=1 // pred_region
      %101 = dma.done [#allocation9], 256
    $region45: #{tpu_custom_call.1} parent=1 // pred_fallthru
      _
    %v102 = vld [vmem:[#allocation2] sm:$0xff]
    %v103 = vld [vmem:[#allocation10] sm:$0xff]
    %v104 = vld [vmem:[#allocation10 + $0x8] sm:$0xff]
    %v105 = vld [vmem:[%s5] sm:$0x1]
    %v107 = vperm.slane %v105, 0
    %vm109 = vcmask 130048
    %v111 = vsel %vm109, %v102, 0
    %113 = vmatpush.msra.mxu0 0.0
    %114 = vmatpush.msra.mxu0 0.0
    %115 = vmatpush.msra.mxu0 0.0
    %116 = vmatpush.msra.mxu0 0.0
    %117 = vmatpush.msra.mxu0 0.0
    %118 = vmatpush.msra.mxu0 0.0
    %119 = vmatpush.msra.mxu0 0.0
    %120 = vmatpush.msra.mxu0 0.0
    %121 = vmatpush.msra.mxu0 0.0
    %122 = vmatpush.msra.mxu0 0.0
    %123 = vmatpush.msra.mxu0 0.0
    %124 = vmatpush.msra.mxu0 0.0
    %125 = vmatpush.msra.mxu0 0.0
    %126 = vmatpush.msra.mxu0 0.0
    %127 = vmatpush.msra.mxu0 %v104
    %128 = vmatpush.msra.mxu0 %v103
    %129 = vmatmul.f32.gmra.mxu0 %v111
    %v130 = vpop.f32.mrf.mxu0
    %v131 = vadd.f32 %v107, %v130
    %132 = vdwg.mxu0
    %v133 = vmul.f32 %v131, 0.17677669
    %v135 = vrot.slane %v133, 1
    %v136 = vrot.slane %v133, 2
    %v137 = vrot.slane %v133, 3
    %v138 = vrot.slane %v133, 4
    %v139 = vrot.slane %v133, 5
    %v140 = vrot.slane %v133, 6
    %v141 = vrot.slane %v133, 7
    %v142 = vld [vmem:[#allocation5] sm:$0xff]
    %v143 = vld [vmem:[#allocation5 + $0x8] sm:$0xff]
    %v144 = vld [vmem:[#allocation5 + $0x10] sm:$0xff]
    %v145 = vld [vmem:[#allocation5 + $0x18] sm:$0xff]
    %v146 = vld [vmem:[#allocation5 + $0x20] sm:$0xff]
    %v147 = vld [vmem:[#allocation5 + $0x28] sm:$0xff]
    %v148 = vld [vmem:[#allocation5 + $0x30] sm:$0xff]
    %v149 = vld [vmem:[#allocation5 + $0x38] sm:$0xff]
    %v150 = vperm.slane %v133, 0
    %v151 = vperm.slane %v135, 0
    %v152 = vperm.slane %v136, 0
    %v153 = vperm.slane %v137, 0
    %v154 = vperm.slane %v138, 0
    %v155 = vperm.slane %v139, 0
    %v156 = vperm.slane %v140, 0
    %v157 = vperm.slane %v141, 0
    %v166 = vmul.f32 %v142, %v150
    %v167 = vmul.f32 %v143, %v151
    %v168 = vmul.f32 %v144, %v152
    %v169 = vmul.f32 %v145, %v153
    %v170 = vmul.f32 %v146, %v154
    %v171 = vmul.f32 %v147, %v155
    %v172 = vmul.f32 %v148, %v156
    %v173 = vmul.f32 %v149, %v157
    %vm174 = vcmask 261120
    %v175 = vsel %vm174, %v166, 0.0
    %176 = vadd.xlane.f32.xlu0 %v175
    %v177 = vpop.xlane.xlu0 %176
    %v178 = vsel %vm174, %v167, 0.0
    %179 = vadd.xlane.f32.xlu0 %v178
    %v180 = vpop.xlane.xlu0 %179
    %v181 = vsel %vm174, %v168, 0.0
    %182 = vadd.xlane.f32.xlu0 %v181
    %v183 = vpop.xlane.xlu0 %182
    %v184 = vsel %vm174, %v169, 0.0
    %185 = vadd.xlane.f32.xlu0 %v184
    %v186 = vpop.xlane.xlu0 %185
    %v187 = vsel %vm174, %v170, 0.0
    %188 = vadd.xlane.f32.xlu0 %v187
    %v189 = vpop.xlane.xlu0 %188
    %v190 = vsel %vm174, %v171, 0.0
    %191 = vadd.xlane.f32.xlu0 %v190
    %v192 = vpop.xlane.xlu0 %191
    %v193 = vsel %vm174, %v172, 0.0
    %194 = vadd.xlane.f32.xlu0 %v193
    %v195 = vpop.xlane.xlu0 %194
    %v196 = vsel %vm174, %v173, 0.0
    %197 = vadd.xlane.f32.xlu0 %v196
    %v198 = vpop.xlane.xlu0 %197
    %v207 = vlaneseq
    %v208 = vand.u32 %v207, 127
    %v209 = vperm.slane %v177, %v208
    %v210 = vperm.slane %v180, %v208
    %v211 = vperm.slane %v183, %v208
    %v212 = vperm.slane %v186, %v208
    %v213 = vperm.slane %v189, %v208
    %v214 = vperm.slane %v192, %v208
    %v215 = vperm.slane %v195, %v208
    %v216 = vperm.slane %v198, %v208
    %vm217 = vcmask 1041409
    %v218 = vsel %vm217, %v210, %v209
    %vm219 = vcmask 1042434
    %v220 = vsel %vm219, %v211, %v218
    %vm221 = vcmask 1043459
    %v222 = vsel %vm221, %v212, %v220
    %vm223 = vcmask 1044484
    %v224 = vsel %vm223, %v213, %v222
    %vm225 = vcmask 1045509
    %v226 = vsel %vm225, %v214, %v224
    %vm227 = vcmask 1046534
    %v228 = vsel %vm227, %v215, %v226
    %vm229 = vcmask 1047559
    %v230 = vsel %vm229, %v216, %v228
    %vm232 = vcmask 64512
    %v233 = vsel %vm232, %v230, -inf
    %234 = vmax.xlane.f32.xlu0 %v233
    %v235 = vpop.xlane.xlu0 %234
    %v237 = vperm.slane %v235, 0
    %v238 = vperm.slane %v235, 1
    %v239 = vperm.slane %v235, 2
    %v240 = vperm.slane %v235, 3
    %v241 = vperm.slane %v235, 4
    %v242 = vperm.slane %v235, 5
    %v243 = vperm.slane %v235, 6
    %v244 = vperm.slane %v235, 7
    %v253 = vsub.f32 %v177, %v237
    %v254 = vsub.f32 %v180, %v238
    %v255 = vsub.f32 %v183, %v239
    %v256 = vsub.f32 %v186, %v240
    %v257 = vsub.f32 %v189, %v241
    %v258 = vsub.f32 %v192, %v242
    %v259 = vsub.f32 %v195, %v243
    %v260 = vsub.f32 %v198, %v244
    %v261 = vmul.f32 %v253, 1.442695
    %v262 = vpow.pop %v261
    %v263 = vmul.f32 %v254, 1.442695
    %v264 = vpow.pop %v263
    %v265 = vmul.f32 %v255, 1.442695
    %v266 = vpow.pop %v265
    %v267 = vmul.f32 %v256, 1.442695
    %v268 = vpow.pop %v267
    %v269 = vmul.f32 %v257, 1.442695
    %v270 = vpow.pop %v269
    %v271 = vmul.f32 %v258, 1.442695
    %v272 = vpow.pop %v271
    %v273 = vmul.f32 %v259, 1.442695
    %v274 = vpow.pop %v273
    %v275 = vmul.f32 %v260, 1.442695
    %v276 = vpow.pop %v275
    %285 = vset.pattern.permute.xlu0 0
    %286 = vperm.xlu0 %285, %v262
    %v287 = vpop.permute.xlu0 %286
    %288 = vset.pattern.permute.xlu0 0
    %289 = vperm.xlu0 %288, %v264
    %v290 = vpop.permute.xlu0 %289
    %291 = vset.pattern.permute.xlu0 0
    %292 = vperm.xlu0 %291, %v266
    %v293 = vpop.permute.xlu0 %292
    %294 = vset.pattern.permute.xlu0 0
    %295 = vperm.xlu0 %294, %v268
    %v296 = vpop.permute.xlu0 %295
    %297 = vset.pattern.permute.xlu0 0
    %298 = vperm.xlu0 %297, %v270
    %v299 = vpop.permute.xlu0 %298
    %300 = vset.pattern.permute.xlu0 0
    %301 = vperm.xlu0 %300, %v272
    %v302 = vpop.permute.xlu0 %301
    %303 = vset.pattern.permute.xlu0 0
    %304 = vperm.xlu0 %303, %v274
    %v305 = vpop.permute.xlu0 %304
    %306 = vset.pattern.permute.xlu0 0
    %307 = vperm.xlu0 %306, %v276
    %v308 = vpop.permute.xlu0 %307
    %v309 = vperm.slane %v287, %v208
    %v310 = vperm.slane %v290, %v208
    %v311 = vperm.slane %v293, %v208
    %v312 = vperm.slane %v296, %v208
    %v313 = vperm.slane %v299, %v208
    %v314 = vperm.slane %v302, %v208
    %v315 = vperm.slane %v305, %v208
    %v316 = vperm.slane %v308, %v208
    %v317 = vsel %vm217, %v310, %v309
    %v318 = vsel %vm219, %v311, %v317
    %v319 = vsel %vm221, %v312, %v318
    %v320 = vsel %vm223, %v313, %v319
    %v321 = vsel %vm225, %v314, %v320
    %v322 = vsel %vm227, %v315, %v321
    %v323 = vsel %vm229, %v316, %v322
    %v325 = vsel %vm232, %v323, 0.0
    %326 = vadd.xlane.f32.xlu0 %v325
    %v327 = vpop.xlane.xlu0 %326
    %v328 = vrcp.pop %v327
    %v330 = vperm.slane %v328, 0
    %v331 = vperm.slane %v328, 1
    %v332 = vperm.slane %v328, 2
    %v333 = vperm.slane %v328, 3
    %v334 = vperm.slane %v328, 4
    %v335 = vperm.slane %v328, 5
    %v336 = vperm.slane %v328, 6
    %v337 = vperm.slane %v328, 7
    %v346 = vmul.f32 %v262, %v330
    %v347 = vmul.f32 %v264, %v331
    %v348 = vmul.f32 %v266, %v332
    %v349 = vmul.f32 %v268, %v333
    %v350 = vmul.f32 %v270, %v334
    %v351 = vmul.f32 %v272, %v335
    %v352 = vmul.f32 %v274, %v336
    %v353 = vmul.f32 %v276, %v337
    %355 = vset.pattern.permute.xlu0 0
    %356 = vperm.xlu0 %355, %v346
    %v357 = vpop.permute.xlu0 %356
    %360 = vset.pattern.permute.xlu0 0
    %361 = vperm.xlu0 %360, %v347
    %v362 = vpop.permute.xlu0 %361
    %365 = vset.pattern.permute.xlu0 0
    %366 = vperm.xlu0 %365, %v348
    %v367 = vpop.permute.xlu0 %366
    %370 = vset.pattern.permute.xlu0 0
    %371 = vperm.xlu0 %370, %v349
    %v372 = vpop.permute.xlu0 %371
    %375 = vset.pattern.permute.xlu0 0
    %376 = vperm.xlu0 %375, %v350
    %v377 = vpop.permute.xlu0 %376
    %380 = vset.pattern.permute.xlu0 0
    %381 = vperm.xlu0 %380, %v351
    %v382 = vpop.permute.xlu0 %381
    %385 = vset.pattern.permute.xlu0 0
    %386 = vperm.xlu0 %385, %v352
    %v387 = vpop.permute.xlu0 %386
    %390 = vset.pattern.permute.xlu0 0
    %391 = vperm.xlu0 %390, %v353
    %v392 = vpop.permute.xlu0 %391
    %v394 = vmul.f32 %v357, %v142
    %v395 = vmul.f32 %v362, %v143
    %v396 = vmul.f32 %v367, %v144
    %v397 = vmul.f32 %v372, %v145
    %v398 = vmul.f32 %v377, %v146
    %v399 = vmul.f32 %v382, %v147
    %v400 = vmul.f32 %v387, %v148
    %v401 = vmul.f32 %v392, %v149
    %v402 = vsel %vm174, %v394, 0.0
    %v403 = vrot.slane %v402, 4
    %v404 = vadd.f32 %v402, %v403
    %v405 = vrot.slane %v404, 2
    %v406 = vadd.f32 %v404, %v405
    %v407 = vrot.slane %v406, 1
    %v408 = vadd.f32 %v406, %v407
    %v409 = vsel %vm174, %v395, 0.0
    %v410 = vrot.slane %v409, 4
    %v411 = vadd.f32 %v409, %v410
    %v412 = vrot.slane %v411, 2
    %v413 = vadd.f32 %v411, %v412
    %v414 = vrot.slane %v413, 1
    %v415 = vadd.f32 %v413, %v414
    %v416 = vsel %vm174, %v396, 0.0
    %v417 = vrot.slane %v416, 4
    %v418 = vadd.f32 %v416, %v417
    %v419 = vrot.slane %v418, 2
    %v420 = vadd.f32 %v418, %v419
    %v421 = vrot.slane %v420, 1
    %v422 = vadd.f32 %v420, %v421
    %v423 = vsel %vm174, %v397, 0.0
    %v424 = vrot.slane %v423, 4
    %v425 = vadd.f32 %v423, %v424
    %v426 = vrot.slane %v425, 2
    %v427 = vadd.f32 %v425, %v426
    %v428 = vrot.slane %v427, 1
    %v429 = vadd.f32 %v427, %v428
    %v430 = vsel %vm174, %v398, 0.0
    %v431 = vrot.slane %v430, 4
    %v432 = vadd.f32 %v430, %v431
    %v433 = vrot.slane %v432, 2
    %v434 = vadd.f32 %v432, %v433
    %v435 = vrot.slane %v434, 1
    %v436 = vadd.f32 %v434, %v435
    %v437 = vsel %vm174, %v399, 0.0
    %v438 = vrot.slane %v437, 4
    %v439 = vadd.f32 %v437, %v438
    %v440 = vrot.slane %v439, 2
    %v441 = vadd.f32 %v439, %v440
    %v442 = vrot.slane %v441, 1
    %v443 = vadd.f32 %v441, %v442
    %v444 = vsel %vm174, %v400, 0.0
    %v445 = vrot.slane %v444, 4
    %v446 = vadd.f32 %v444, %v445
    %v447 = vrot.slane %v446, 2
    %v448 = vadd.f32 %v446, %v447
    %v449 = vrot.slane %v448, 1
    %v450 = vadd.f32 %v448, %v449
    %v451 = vsel %vm174, %v401, 0.0
    %v452 = vrot.slane %v451, 4
    %v453 = vadd.f32 %v451, %v452
    %v454 = vrot.slane %v453, 2
    %v455 = vadd.f32 %v453, %v454
    %v456 = vrot.slane %v455, 1
    %v457 = vadd.f32 %v455, %v456
    %v458 = vld [vmem:[#allocation7] sm:$0xff]
    %v459 = vld [vmem:[#allocation7 + $0x8] sm:$0xff]
    %v460 = vld [vmem:[#allocation7 + $0x10] sm:$0xff]
    %v461 = vld [vmem:[#allocation7 + $0x18] sm:$0xff]
    %v462 = vld [vmem:[#allocation7 + $0x20] sm:$0xff]
    %v463 = vld [vmem:[#allocation7 + $0x28] sm:$0xff]
    %v464 = vld [vmem:[#allocation7 + $0x30] sm:$0xff]
    %v465 = vld [vmem:[#allocation7 + $0x38] sm:$0xff]
    %v466 = vmul.f32 %v458, %v150
    %v467 = vmul.f32 %v459, %v151
    %v468 = vmul.f32 %v460, %v152
    %v469 = vmul.f32 %v461, %v153
    %v470 = vmul.f32 %v462, %v154
    %v471 = vmul.f32 %v463, %v155
    %v472 = vmul.f32 %v464, %v156
    %v473 = vmul.f32 %v465, %v157
    %v474 = vsel %vm174, %v466, 0.0
    %475 = vadd.xlane.f32.xlu0 %v474
    %v476 = vpop.xlane.xlu0 %475
    %v477 = vsel %vm174, %v467, 0.0
    %478 = vadd.xlane.f32.xlu0 %v477
    %v479 = vpop.xlane.xlu0 %478
    %v480 = vsel %vm174, %v468, 0.0
    %481 = vadd.xlane.f32.xlu0 %v480
    %v482 = vpop.xlane.xlu0 %481
    %v483 = vsel %vm174, %v469, 0.0
    %484 = vadd.xlane.f32.xlu0 %v483
    %v485 = vpop.xlane.xlu0 %484
    %v486 = vsel %vm174, %v470, 0.0
    %487 = vadd.xlane.f32.xlu0 %v486
    %v488 = vpop.xlane.xlu0 %487
    %v489 = vsel %vm174, %v471, 0.0
    %490 = vadd.xlane.f32.xlu0 %v489
    %v491 = vpop.xlane.xlu0 %490
    %v492 = vsel %vm174, %v472, 0.0
    %493 = vadd.xlane.f32.xlu0 %v492
    %v494 = vpop.xlane.xlu0 %493
    %v495 = vsel %vm174, %v473, 0.0
    %496 = vadd.xlane.f32.xlu0 %v495
    %v497 = vpop.xlane.xlu0 %496
    %v506 = vperm.slane %v476, %v208
    %v507 = vperm.slane %v479, %v208
    %v508 = vperm.slane %v482, %v208
    %v509 = vperm.slane %v485, %v208
    %v510 = vperm.slane %v488, %v208
    %v511 = vperm.slane %v491, %v208
    %v512 = vperm.slane %v494, %v208
    %v513 = vperm.slane %v497, %v208
    %v514 = vsel %vm217, %v507, %v506
    %v515 = vsel %vm219, %v508, %v514
    %v516 = vsel %vm221, %v509, %v515
    %v517 = vsel %vm223, %v510, %v516
    %v518 = vsel %vm225, %v511, %v517
    %v519 = vsel %vm227, %v512, %v518
    %v520 = vsel %vm229, %v513, %v519
    %v522 = vsel %vm232, %v520, -inf
    %523 = vmax.xlane.f32.xlu0 %v522
    %v524 = vpop.xlane.xlu0 %523
    %v526 = vperm.slane %v524, 0
    %v527 = vperm.slane %v524, 1
    %v528 = vperm.slane %v524, 2
    %v529 = vperm.slane %v524, 3
    %v530 = vperm.slane %v524, 4
    %v531 = vperm.slane %v524, 5
    %v532 = vperm.slane %v524, 6
    %v533 = vperm.slane %v524, 7
    %v542 = vsub.f32 %v476, %v526
    %v543 = vsub.f32 %v479, %v527
    %v544 = vsub.f32 %v482, %v528
    %v545 = vsub.f32 %v485, %v529
    %v546 = vsub.f32 %v488, %v530
    %v547 = vsub.f32 %v491, %v531
    %v548 = vsub.f32 %v494, %v532
    %v549 = vsub.f32 %v497, %v533
    %v550 = vmul.f32 %v542, 1.442695
    %v551 = vpow.pop %v550
    %v552 = vmul.f32 %v543, 1.442695
    %v553 = vpow.pop %v552
    %v554 = vmul.f32 %v544, 1.442695
    %v555 = vpow.pop %v554
    %v556 = vmul.f32 %v545, 1.442695
    %v557 = vpow.pop %v556
    %v558 = vmul.f32 %v546, 1.442695
    %v559 = vpow.pop %v558
    %v560 = vmul.f32 %v547, 1.442695
    %v561 = vpow.pop %v560
    %v562 = vmul.f32 %v548, 1.442695
    %v563 = vpow.pop %v562
    %v564 = vmul.f32 %v549, 1.442695
    %v565 = vpow.pop %v564
    %574 = vset.pattern.permute.xlu0 0
    %575 = vperm.xlu0 %574, %v551
    %v576 = vpop.permute.xlu0 %575
    %577 = vset.pattern.permute.xlu0 0
    %578 = vperm.xlu0 %577, %v553
    %v579 = vpop.permute.xlu0 %578
    %580 = vset.pattern.permute.xlu0 0
    %581 = vperm.xlu0 %580, %v555
    %v582 = vpop.permute.xlu0 %581
    %583 = vset.pattern.permute.xlu0 0
    %584 = vperm.xlu0 %583, %v557
    %v585 = vpop.permute.xlu0 %584
    %586 = vset.pattern.permute.xlu0 0
    %587 = vperm.xlu0 %586, %v559
    %v588 = vpop.permute.xlu0 %587
    %589 = vset.pattern.permute.xlu0 0
    %590 = vperm.xlu0 %589, %v561
    %v591 = vpop.permute.xlu0 %590
    %592 = vset.pattern.permute.xlu0 0
    %593 = vperm.xlu0 %592, %v563
    %v594 = vpop.permute.xlu0 %593
    %595 = vset.pattern.permute.xlu0 0
    %596 = vperm.xlu0 %595, %v565
    %v597 = vpop.permute.xlu0 %596
    %v598 = vperm.slane %v576, %v208
    %v599 = vperm.slane %v579, %v208
    %v600 = vperm.slane %v582, %v208
    %v601 = vperm.slane %v585, %v208
    %v602 = vperm.slane %v588, %v208
    %v603 = vperm.slane %v591, %v208
    %v604 = vperm.slane %v594, %v208
    %v605 = vperm.slane %v597, %v208
    %v606 = vsel %vm217, %v599, %v598
    %v607 = vsel %vm219, %v600, %v606
    %v608 = vsel %vm221, %v601, %v607
    %v609 = vsel %vm223, %v602, %v608
    %v610 = vsel %vm225, %v603, %v609
    %v611 = vsel %vm227, %v604, %v610
    %v612 = vsel %vm229, %v605, %v611
    %v614 = vsel %vm232, %v612, 0.0
    %615 = vadd.xlane.f32.xlu0 %v614
    %v616 = vpop.xlane.xlu0 %615
    %v617 = vrcp.pop %v616
    %v619 = vperm.slane %v617, 0
    %v620 = vperm.slane %v617, 1
    %v621 = vperm.slane %v617, 2
    %v622 = vperm.slane %v617, 3
    %v623 = vperm.slane %v617, 4
    %v624 = vperm.slane %v617, 5
    %v625 = vperm.slane %v617, 6
    %v626 = vperm.slane %v617, 7
    %v635 = vmul.f32 %v551, %v619
    %v636 = vmul.f32 %v553, %v620
    %v637 = vmul.f32 %v555, %v621
    %v638 = vmul.f32 %v557, %v622
    %v639 = vmul.f32 %v559, %v623
    %v640 = vmul.f32 %v561, %v624
    %v641 = vmul.f32 %v563, %v625
    %v642 = vmul.f32 %v565, %v626
    %644 = vset.pattern.permute.xlu0 0
    %645 = vperm.xlu0 %644, %v635
    %v646 = vpop.permute.xlu0 %645
    %649 = vset.pattern.permute.xlu0 0
    %650 = vperm.xlu0 %649, %v636
    %v651 = vpop.permute.xlu0 %650
    %654 = vset.pattern.permute.xlu0 0
    %655 = vperm.xlu0 %654, %v637
    %v656 = vpop.permute.xlu0 %655
    %659 = vset.pattern.permute.xlu0 0
    %660 = vperm.xlu0 %659, %v638
    %v661 = vpop.permute.xlu0 %660
    %664 = vset.pattern.permute.xlu0 0
    %665 = vperm.xlu0 %664, %v639
    %v666 = vpop.permute.xlu0 %665
    %669 = vset.pattern.permute.xlu0 0
    %670 = vperm.xlu0 %669, %v640
    %v671 = vpop.permute.xlu0 %670
    %674 = vset.pattern.permute.xlu0 0
    %675 = vperm.xlu0 %674, %v641
    %v676 = vpop.permute.xlu0 %675
    %679 = vset.pattern.permute.xlu0 0
    %680 = vperm.xlu0 %679, %v642
    %v681 = vpop.permute.xlu0 %680
    %v683 = vmul.f32 %v646, %v458
    %v684 = vmul.f32 %v651, %v459
    %v685 = vmul.f32 %v656, %v460
    %v686 = vmul.f32 %v661, %v461
    %v687 = vmul.f32 %v666, %v462
    %v688 = vmul.f32 %v671, %v463
    %v689 = vmul.f32 %v676, %v464
    %v690 = vmul.f32 %v681, %v465
    %v691 = vsel %vm174, %v683, 0.0
    %v692 = vrot.slane %v691, 4
    %v693 = vadd.f32 %v691, %v692
    %v694 = vrot.slane %v693, 2
    %v695 = vadd.f32 %v693, %v694
    %v696 = vrot.slane %v695, 1
    %v697 = vadd.f32 %v695, %v696
    %v698 = vsel %vm174, %v684, 0.0
    %v699 = vrot.slane %v698, 4
    %v700 = vadd.f32 %v698, %v699
    %v701 = vrot.slane %v700, 2
    %v702 = vadd.f32 %v700, %v701
    %v703 = vrot.slane %v702, 1
    %v704 = vadd.f32 %v702, %v703
    %v705 = vsel %vm174, %v685, 0.0
    %v706 = vrot.slane %v705, 4
    %v707 = vadd.f32 %v705, %v706
    %v708 = vrot.slane %v707, 2
    %v709 = vadd.f32 %v707, %v708
    %v710 = vrot.slane %v709, 1
    %v711 = vadd.f32 %v709, %v710
    %v712 = vsel %vm174, %v686, 0.0
    %v713 = vrot.slane %v712, 4
    %v714 = vadd.f32 %v712, %v713
    %v715 = vrot.slane %v714, 2
    %v716 = vadd.f32 %v714, %v715
    %v717 = vrot.slane %v716, 1
    %v718 = vadd.f32 %v716, %v717
    %v719 = vsel %vm174, %v687, 0.0
    %v720 = vrot.slane %v719, 4
    %v721 = vadd.f32 %v719, %v720
    %v722 = vrot.slane %v721, 2
    %v723 = vadd.f32 %v721, %v722
    %v724 = vrot.slane %v723, 1
    %v725 = vadd.f32 %v723, %v724
    %v726 = vsel %vm174, %v688, 0.0
    %v727 = vrot.slane %v726, 4
    %v728 = vadd.f32 %v726, %v727
    %v729 = vrot.slane %v728, 2
    %v730 = vadd.f32 %v728, %v729
    %v731 = vrot.slane %v730, 1
    %v732 = vadd.f32 %v730, %v731
    %v733 = vsel %vm174, %v689, 0.0
    %v734 = vrot.slane %v733, 4
    %v735 = vadd.f32 %v733, %v734
    %v736 = vrot.slane %v735, 2
    %v737 = vadd.f32 %v735, %v736
    %v738 = vrot.slane %v737, 1
    %v739 = vadd.f32 %v737, %v738
    %v740 = vsel %vm174, %v690, 0.0
    %v741 = vrot.slane %v740, 4
    %v742 = vadd.f32 %v740, %v741
    %v743 = vrot.slane %v742, 2
    %v744 = vadd.f32 %v742, %v743
    %v745 = vrot.slane %v744, 1
    %v746 = vadd.f32 %v744, %v745
    %v747 = vld [vmem:[#allocation8] sm:$0xff]
    %v748 = vld [vmem:[#allocation8 + $0x8] sm:$0xff]
    %v749 = vld [vmem:[#allocation8 + $0x10] sm:$0xff]
    %v750 = vld [vmem:[#allocation8 + $0x18] sm:$0xff]
    %v751 = vld [vmem:[#allocation8 + $0x20] sm:$0xff]
    %v752 = vld [vmem:[#allocation8 + $0x28] sm:$0xff]
    %v753 = vld [vmem:[#allocation8 + $0x30] sm:$0xff]
    %v754 = vld [vmem:[#allocation8 + $0x38] sm:$0xff]
    %v755 = vmul.f32 %v747, %v150
    %v756 = vmul.f32 %v748, %v151
    %v757 = vmul.f32 %v749, %v152
    %v758 = vmul.f32 %v750, %v153
    %v759 = vmul.f32 %v751, %v154
    %v760 = vmul.f32 %v752, %v155
    %v761 = vmul.f32 %v753, %v156
    %v762 = vmul.f32 %v754, %v157
    %v763 = vsel %vm174, %v755, 0.0
    %764 = vadd.xlane.f32.xlu0 %v763
    %v765 = vpop.xlane.xlu0 %764
    %v766 = vsel %vm174, %v756, 0.0
    %767 = vadd.xlane.f32.xlu0 %v766
    %v768 = vpop.xlane.xlu0 %767
    %v769 = vsel %vm174, %v757, 0.0
    %770 = vadd.xlane.f32.xlu0 %v769
    %v771 = vpop.xlane.xlu0 %770
    %v772 = vsel %vm174, %v758, 0.0
    %773 = vadd.xlane.f32.xlu0 %v772
    %v774 = vpop.xlane.xlu0 %773
    %v775 = vsel %vm174, %v759, 0.0
    %776 = vadd.xlane.f32.xlu0 %v775
    %v777 = vpop.xlane.xlu0 %776
    %v778 = vsel %vm174, %v760, 0.0
    %779 = vadd.xlane.f32.xlu0 %v778
    %v780 = vpop.xlane.xlu0 %779
    %v781 = vsel %vm174, %v761, 0.0
    %782 = vadd.xlane.f32.xlu0 %v781
    %v783 = vpop.xlane.xlu0 %782
    %v784 = vsel %vm174, %v762, 0.0
    %785 = vadd.xlane.f32.xlu0 %v784
    %v786 = vpop.xlane.xlu0 %785
    %v795 = vperm.slane %v765, %v208
    %v796 = vperm.slane %v768, %v208
    %v797 = vperm.slane %v771, %v208
    %v798 = vperm.slane %v774, %v208
    %v799 = vperm.slane %v777, %v208
    %v800 = vperm.slane %v780, %v208
    %v801 = vperm.slane %v783, %v208
    %v802 = vperm.slane %v786, %v208
    %v803 = vsel %vm217, %v796, %v795
    %v804 = vsel %vm219, %v797, %v803
    %v805 = vsel %vm221, %v798, %v804
    %v806 = vsel %vm223, %v799, %v805
    %v807 = vsel %vm225, %v800, %v806
    %v808 = vsel %vm227, %v801, %v807
    %v809 = vsel %vm229, %v802, %v808
    %v811 = vsel %vm232, %v809, -inf
    %812 = vmax.xlane.f32.xlu0 %v811
    %v813 = vpop.xlane.xlu0 %812
    %v815 = vperm.slane %v813, 0
    %v816 = vperm.slane %v813, 1
    %v817 = vperm.slane %v813, 2
    %v818 = vperm.slane %v813, 3
    %v819 = vperm.slane %v813, 4
    %v820 = vperm.slane %v813, 5
    %v821 = vperm.slane %v813, 6
    %v822 = vperm.slane %v813, 7
    %v831 = vsub.f32 %v765, %v815
    %v832 = vsub.f32 %v768, %v816
    %v833 = vsub.f32 %v771, %v817
    %v834 = vsub.f32 %v774, %v818
    %v835 = vsub.f32 %v777, %v819
    %v836 = vsub.f32 %v780, %v820
    %v837 = vsub.f32 %v783, %v821
    %v838 = vsub.f32 %v786, %v822
    %v839 = vmul.f32 %v831, 1.442695
    %v840 = vpow.pop %v839
    %v841 = vmul.f32 %v832, 1.442695
    %v842 = vpow.pop %v841
    %v843 = vmul.f32 %v833, 1.442695
    %v844 = vpow.pop %v843
    %v845 = vmul.f32 %v834, 1.442695
    %v846 = vpow.pop %v845
    %v847 = vmul.f32 %v835, 1.442695
    %v848 = vpow.pop %v847
    %v849 = vmul.f32 %v836, 1.442695
    %v850 = vpow.pop %v849
    %v851 = vmul.f32 %v837, 1.442695
    %v852 = vpow.pop %v851
    %v853 = vmul.f32 %v838, 1.442695
    %v854 = vpow.pop %v853
    %863 = vset.pattern.permute.xlu0 0
    %864 = vperm.xlu0 %863, %v840
    %v865 = vpop.permute.xlu0 %864
    %866 = vset.pattern.permute.xlu0 0
    %867 = vperm.xlu0 %866, %v842
    %v868 = vpop.permute.xlu0 %867
    %869 = vset.pattern.permute.xlu0 0
    %870 = vperm.xlu0 %869, %v844
    %v871 = vpop.permute.xlu0 %870
    %872 = vset.pattern.permute.xlu0 0
    %873 = vperm.xlu0 %872, %v846
    %v874 = vpop.permute.xlu0 %873
    %875 = vset.pattern.permute.xlu0 0
    %876 = vperm.xlu0 %875, %v848
    %v877 = vpop.permute.xlu0 %876
    %878 = vset.pattern.permute.xlu0 0
    %879 = vperm.xlu0 %878, %v850
    %v880 = vpop.permute.xlu0 %879
    %881 = vset.pattern.permute.xlu0 0
    %882 = vperm.xlu0 %881, %v852
    %v883 = vpop.permute.xlu0 %882
    %884 = vset.pattern.permute.xlu0 0
    %885 = vperm.xlu0 %884, %v854
    %v886 = vpop.permute.xlu0 %885
    %v887 = vperm.slane %v865, %v208
    %v888 = vperm.slane %v868, %v208
    %v889 = vperm.slane %v871, %v208
    %v890 = vperm.slane %v874, %v208
    %v891 = vperm.slane %v877, %v208
    %v892 = vperm.slane %v880, %v208
    %v893 = vperm.slane %v883, %v208
    %v894 = vperm.slane %v886, %v208
    %v895 = vsel %vm217, %v888, %v887
    %v896 = vsel %vm219, %v889, %v895
    %v897 = vsel %vm221, %v890, %v896
    %v898 = vsel %vm223, %v891, %v897
    %v899 = vsel %vm225, %v892, %v898
    %v900 = vsel %vm227, %v893, %v899
    %v901 = vsel %vm229, %v894, %v900
    %v903 = vsel %vm232, %v901, 0.0
    %904 = vadd.xlane.f32.xlu0 %v903
    %v905 = vpop.xlane.xlu0 %904
    %v906 = vrcp.pop %v905
    %v908 = vperm.slane %v906, 0
    %v909 = vperm.slane %v906, 1
    %v910 = vperm.slane %v906, 2
    %v911 = vperm.slane %v906, 3
    %v912 = vperm.slane %v906, 4
    %v913 = vperm.slane %v906, 5
    %v914 = vperm.slane %v906, 6
    %v915 = vperm.slane %v906, 7
    %v924 = vmul.f32 %v840, %v908
    %v925 = vmul.f32 %v842, %v909
    %v926 = vmul.f32 %v844, %v910
    %v927 = vmul.f32 %v846, %v911
    %v928 = vmul.f32 %v848, %v912
    %v929 = vmul.f32 %v850, %v913
    %v930 = vmul.f32 %v852, %v914
    %v931 = vmul.f32 %v854, %v915
    %933 = vset.pattern.permute.xlu0 0
    %934 = vperm.xlu0 %933, %v924
    %v935 = vpop.permute.xlu0 %934
    %938 = vset.pattern.permute.xlu0 0
    %939 = vperm.xlu0 %938, %v925
    %v940 = vpop.permute.xlu0 %939
    %943 = vset.pattern.permute.xlu0 0
    %944 = vperm.xlu0 %943, %v926
    %v945 = vpop.permute.xlu0 %944
    %948 = vset.pattern.permute.xlu0 0
    %949 = vperm.xlu0 %948, %v927
    %v950 = vpop.permute.xlu0 %949
    %953 = vset.pattern.permute.xlu0 0
    %954 = vperm.xlu0 %953, %v928
    %v955 = vpop.permute.xlu0 %954
    %958 = vset.pattern.permute.xlu0 0
    %959 = vperm.xlu0 %958, %v929
    %v960 = vpop.permute.xlu0 %959
    %963 = vset.pattern.permute.xlu0 0
    %964 = vperm.xlu0 %963, %v930
    %v965 = vpop.permute.xlu0 %964
    %968 = vset.pattern.permute.xlu0 0
    %969 = vperm.xlu0 %968, %v931
    %v970 = vpop.permute.xlu0 %969
    %v972 = vmul.f32 %v935, %v747
    %v973 = vmul.f32 %v940, %v748
    %v974 = vmul.f32 %v945, %v749
    %v975 = vmul.f32 %v950, %v750
    %v976 = vmul.f32 %v955, %v751
    %v977 = vmul.f32 %v960, %v752
    %v978 = vmul.f32 %v965, %v753
    %v979 = vmul.f32 %v970, %v754
    %v980 = vsel %vm174, %v972, 0.0
    %v981 = vrot.slane %v980, 4
    %v982 = vadd.f32 %v980, %v981
    %v983 = vrot.slane %v982, 2
    %v984 = vadd.f32 %v982, %v983
    %v985 = vrot.slane %v984, 1
    %v986 = vadd.f32 %v984, %v985
    %v987 = vsel %vm174, %v973, 0.0
    %v988 = vrot.slane %v987, 4
    %v989 = vadd.f32 %v987, %v988
    %v990 = vrot.slane %v989, 2
    %v991 = vadd.f32 %v989, %v990
    %v992 = vrot.slane %v991, 1
    %v993 = vadd.f32 %v991, %v992
    %v994 = vsel %vm174, %v974, 0.0
    %v995 = vrot.slane %v994, 4
    %v996 = vadd.f32 %v994, %v995
    %v997 = vrot.slane %v996, 2
    %v998 = vadd.f32 %v996, %v997
    %v999 = vrot.slane %v998, 1
    %v1000 = vadd.f32 %v998, %v999
    %v1001 = vsel %vm174, %v975, 0.0
    %v1002 = vrot.slane %v1001, 4
    %v1003 = vadd.f32 %v1001, %v1002
    %v1004 = vrot.slane %v1003, 2
    %v1005 = vadd.f32 %v1003, %v1004
    %v1006 = vrot.slane %v1005, 1
    %v1007 = vadd.f32 %v1005, %v1006
    %v1008 = vsel %vm174, %v976, 0.0
    %v1009 = vrot.slane %v1008, 4
    %v1010 = vadd.f32 %v1008, %v1009
    %v1011 = vrot.slane %v1010, 2
    %v1012 = vadd.f32 %v1010, %v1011
    %v1013 = vrot.slane %v1012, 1
    %v1014 = vadd.f32 %v1012, %v1013
    %v1015 = vsel %vm174, %v977, 0.0
    %v1016 = vrot.slane %v1015, 4
    %v1017 = vadd.f32 %v1015, %v1016
    %v1018 = vrot.slane %v1017, 2
    %v1019 = vadd.f32 %v1017, %v1018
    %v1020 = vrot.slane %v1019, 1
    %v1021 = vadd.f32 %v1019, %v1020
    %v1022 = vsel %vm174, %v978, 0.0
    %v1023 = vrot.slane %v1022, 4
    %v1024 = vadd.f32 %v1022, %v1023
    %v1025 = vrot.slane %v1024, 2
    %v1026 = vadd.f32 %v1024, %v1025
    %v1027 = vrot.slane %v1026, 1
    %v1028 = vadd.f32 %v1026, %v1027
    %v1029 = vsel %vm174, %v979, 0.0
    %v1030 = vrot.slane %v1029, 4
    %v1031 = vadd.f32 %v1029, %v1030
    %v1032 = vrot.slane %v1031, 2
    %v1033 = vadd.f32 %v1031, %v1032
    %v1034 = vrot.slane %v1033, 1
    %v1035 = vadd.f32 %v1033, %v1034
    %1036 = vrot.lane.b32.xlu0 %v133, 96
    %v1037 = vpop.permute.xlu0 %1036
    %1038 = vrot.lane.b32.xlu0 %v135, 96
    %v1039 = vpop.permute.xlu0 %1038
    %1040 = vrot.lane.b32.xlu0 %v136, 96
    %v1041 = vpop.permute.xlu0 %1040
    %1042 = vrot.lane.b32.xlu0 %v137, 96
    %v1043 = vpop.permute.xlu0 %1042
    %1044 = vrot.lane.b32.xlu0 %v138, 96
    %v1045 = vpop.permute.xlu0 %1044
    %1046 = vrot.lane.b32.xlu0 %v139, 96
    %v1047 = vpop.permute.xlu0 %1046
    %1048 = vrot.lane.b32.xlu0 %v140, 96
    %v1049 = vpop.permute.xlu0 %1048
    %1050 = vrot.lane.b32.xlu0 %v141, 96
    %v1051 = vpop.permute.xlu0 %1050
    %v1060 = vmul.f32 %v408, %v1037
    %v1061 = vmul.f32 %v415, %v1039
    %v1062 = vmul.f32 %v422, %v1041
    %v1063 = vmul.f32 %v429, %v1043
    %v1064 = vmul.f32 %v436, %v1045
    %v1065 = vmul.f32 %v443, %v1047
    %v1066 = vmul.f32 %v450, %v1049
    %v1067 = vmul.f32 %v457, %v1051
    %v1076 = vrot.slane %v1061, 7
    %v1077 = vsel %vm217, %v1076, %v1060
    %v1078 = vrot.slane %v1062, 6
    %v1079 = vsel %vm219, %v1078, %v1077
    %v1080 = vrot.slane %v1063, 5
    %v1081 = vsel %vm221, %v1080, %v1079
    %v1082 = vrot.slane %v1064, 4
    %v1083 = vsel %vm223, %v1082, %v1081
    %v1084 = vrot.slane %v1065, 3
    %v1085 = vsel %vm225, %v1084, %v1083
    %v1086 = vrot.slane %v1066, 2
    %v1087 = vsel %vm227, %v1086, %v1085
    %v1088 = vrot.slane %v1067, 1
    %v1089 = vsel %vm229, %v1088, %v1087
    %v1091 = vsel %vm174, %v1089, 0.0
    %1092 = vadd.xlane.f32.xlu0 %v1091
    %v1093 = vpop.xlane.xlu0 %1092
    %v1094 = vmul.f32 %v697, %v1037
    %v1095 = vmul.f32 %v704, %v1039
    %v1096 = vmul.f32 %v711, %v1041
    %v1097 = vmul.f32 %v718, %v1043
    %v1098 = vmul.f32 %v725, %v1045
    %v1099 = vmul.f32 %v732, %v1047
    %v1100 = vmul.f32 %v739, %v1049
    %v1101 = vmul.f32 %v746, %v1051
    %v1110 = vrot.slane %v1095, 7
    %v1111 = vsel %vm217, %v1110, %v1094
    %v1112 = vrot.slane %v1096, 6
    %v1113 = vsel %vm219, %v1112, %v1111
    %v1114 = vrot.slane %v1097, 5
    %v1115 = vsel %vm221, %v1114, %v1113
    %v1116 = vrot.slane %v1098, 4
    %v1117 = vsel %vm223, %v1116, %v1115
    %v1118 = vrot.slane %v1099, 3
    %v1119 = vsel %vm225, %v1118, %v1117
    %v1120 = vrot.slane %v1100, 2
    %v1121 = vsel %vm227, %v1120, %v1119
    %v1122 = vrot.slane %v1101, 1
    %v1123 = vsel %vm229, %v1122, %v1121
    %v1125 = vsel %vm174, %v1123, 0.0
    %1126 = vadd.xlane.f32.xlu0 %v1125
    %v1127 = vpop.xlane.xlu0 %1126
    %v1128 = vmul.f32 %v986, %v1037
    %v1129 = vmul.f32 %v993, %v1039
    %v1130 = vmul.f32 %v1000, %v1041
    %v1131 = vmul.f32 %v1007, %v1043
    %v1132 = vmul.f32 %v1014, %v1045
    %v1133 = vmul.f32 %v1021, %v1047
    %v1134 = vmul.f32 %v1028, %v1049
    %v1135 = vmul.f32 %v1035, %v1051
    %v1144 = vrot.slane %v1129, 7
    %v1145 = vsel %vm217, %v1144, %v1128
    %v1146 = vrot.slane %v1130, 6
    %v1147 = vsel %vm219, %v1146, %v1145
    %v1148 = vrot.slane %v1131, 5
    %v1149 = vsel %vm221, %v1148, %v1147
    %v1150 = vrot.slane %v1132, 4
    %v1151 = vsel %vm223, %v1150, %v1149
    %v1152 = vrot.slane %v1133, 3
    %v1153 = vsel %vm225, %v1152, %v1151
    %v1154 = vrot.slane %v1134, 2
    %v1155 = vsel %vm227, %v1154, %v1153
    %v1156 = vrot.slane %v1135, 1
    %v1157 = vsel %vm229, %v1156, %v1155
    %v1159 = vsel %vm174, %v1157, 0.0
    %1160 = vadd.xlane.f32.xlu0 %v1159
    %v1161 = vpop.xlane.xlu0 %1160
    %v1162 = vmax.f32 %v1093, %v1127
    %v1163 = vmax.f32 %v1162, %v1161
    %v1164 = vsub.f32 %v1093, %v1163
    %v1165 = vmul.f32 %v1164, 1.442695
    %v1166 = vpow.pop %v1165
    %v1167 = vsub.f32 %v1127, %v1163
    %v1168 = vmul.f32 %v1167, 1.442695
    %v1169 = vpow.pop %v1168
    %v1170 = vsub.f32 %v1161, %v1163
    %v1171 = vmul.f32 %v1170, 1.442695
    %v1172 = vpow.pop %v1171
    %v1173 = vadd.f32 %v1166, %v1169
    %v1174 = vadd.f32 %v1173, %v1172
    %v1183 = vsel %vm217, %v415, %v408
    %v1184 = vsel %vm219, %v422, %v1183
    %v1185 = vsel %vm221, %v429, %v1184
    %v1186 = vsel %vm223, %v436, %v1185
    %v1187 = vsel %vm225, %v443, %v1186
    %v1188 = vsel %vm227, %v450, %v1187
    %v1189 = vsel %vm229, %v457, %v1188
    %v1191 = vmul.f32 %v1166, %v1189
    %v1200 = vsel %vm217, %v704, %v697
    %v1201 = vsel %vm219, %v711, %v1200
    %v1202 = vsel %vm221, %v718, %v1201
    %v1203 = vsel %vm223, %v725, %v1202
    %v1204 = vsel %vm225, %v732, %v1203
    %v1205 = vsel %vm227, %v739, %v1204
    %v1206 = vsel %vm229, %v746, %v1205
    %v1208 = vmul.f32 %v1169, %v1206
    %v1217 = vsel %vm217, %v993, %v986
    %v1218 = vsel %vm219, %v1000, %v1217
    %v1219 = vsel %vm221, %v1007, %v1218
    %v1220 = vsel %vm223, %v1014, %v1219
    %v1221 = vsel %vm225, %v1021, %v1220
    %v1222 = vsel %vm227, %v1028, %v1221
    %v1223 = vsel %vm229, %v1035, %v1222
    %v1225 = vmul.f32 %v1172, %v1223
    %v1226 = vadd.f32 %v1191, %v1208
    %v1227 = vadd.f32 %v1226, %v1225
    %v1228 = vrcp.pop %v1174
    %v1229 = vmul.f32 %v1227, %v1228
    %1230 = vst.msk [vmem:[#allocation11] sm:$0xff] %vm174, %v1229
    // Predicated region
    $region46: #{tpu_custom_call.1} parent=1 // pred_check
      _
    $region47: #{tpu_custom_call.1} parent=1 // pred_check_branch
      %1232 = sbr.rel (0) target = $region49
    $region48: #{tpu_custom_call.1} parent=1 // pred_region
      %1234 = vsyncadd [#allocation4], 96
      %s1235 = sshll.u32 [#allocation11], 4
      %s1236 = int_to_ptr.vmem [resolvable:$true] %s1235
      %s1237 = sshll.u32 %s6, 4
      %s1238 = int_to_ptr.hbm [resolvable:$true] %s1237
      %1243 = dma.vmem_to_hbm [thread:$0]  %s1236, 32, %s1238, [#allocation4], 32, 32, 2
    $region49: #{tpu_custom_call.1} parent=1 // pred_fallthru
      _
    // Predicated region
    $region50: #{tpu_custom_call.1} parent=1 // pred_check
      _
    $region51: #{tpu_custom_call.1} parent=1 // pred_check_branch
      %1245 = sbr.rel (0) target = $region53
    $region52: #{tpu_custom_call.1} parent=1 // pred_region
      %1247 = dma.done [#allocation4], 128
    $region53: #{tpu_custom_call.1} parent=1 // pred_fallthru
      _
    %1248 = vsyncpa [#allocation3], 1
    %1249 = vsyncpa [#allocation6], 1
    %1250 = vsyncpa [#allocation9], 1
    %1251 = vsyncpa [#allocation4], 1

</llo_original>
